<compile_context>
chip_gen: v7x
topology: tpu7x:2x2x1
jax: 0.10.0
libtpu: 0.0.40
codegen_flags: <defaults>
</compile_context>

<pallas_src>
import jax
import jax.numpy as jnp
from jax.experimental import pallas as pl
from jax.experimental.pallas import tpu as pltpu

_LANE = 128


def _round_up(a, m):
    return ((a + m - 1) // m) * m


def _vmem_capacity_bytes():
    try:
        cap = int(getattr(pltpu.get_tpu_info(), "vmem_capacity_bytes", 0))
        if cap > 0:
            return cap
    except Exception:
        pass
    return 64 << 20  # conservative default: v7x per-TensorCore VMEM


def _plan_tiles(B, L, c_in, c_out, K, P, in_itemsize, out_itemsize,
                block_l=None, block_b=None):
    """Pick (T, nL, L_pad, Bt, vmem_limit_bytes) from the VMEM budget."""
    cap = _vmem_capacity_bytes()
    budget = cap // 3  # headroom for double-buffering slack / compiler temps
    # Bytes per output column per batch element: double-buffered in/out tiles,
    # the xx/xcol im2col temporaries and the f32 accumulator.
    per_lane = (2 * (c_in * in_itemsize + c_out * out_itemsize)
                + (K + 1) * c_in * in_itemsize
                + c_out * 4)
    max_cols = max(_LANE, budget // per_lane)

    if block_l is not None:
        T = int(block_l)
    else:
        T_max = max(_LANE, (max_cols // _LANE) * _LANE)
        L128 = _round_up(L, _LANE)
        T = min(L128, T_max)
        if T < L128:
            T = max(T, _round_up(max(P, 1), _LANE))  # tile must cover the halo
    L_pad = _round_up(L, T)
    nL = L_pad // T
    if nL > 1:
        assert T >= P, "length tile must cover the causal halo (K-1)*dilation"

    if block_b is not None:
        Bt = int(block_b)
        assert B % Bt == 0, "batch sub-block must divide B"
    else:
        bt_cap = min(max(1, max_cols // T), 32, B)  # bound in-kernel unroll
        Bt = 1
        for d in range(1, B + 1):
            if B % d == 0 and d <= bt_cap:
                Bt = d

    needed = Bt * T * per_lane + (1 << 20)
    vmem_limit = int(min(0.9 * cap, max(needed, 32 << 20)))
    vmem_limit = max(vmem_limit, 16 << 20)
    return T, nL, L_pad, Bt, vmem_limit


def _make_causal_conv_kernel(c_out, c_in, K, dilation, T, Bt, carry_halo):
    P = (K - 1) * dilation

    def kernel(x_ref, w_ref, b_ref, o_ref, *scratch):
        # x_ref : (Bt, C_in, T)      input tile (batch sub-block x length tile)
        # w_ref : (C_out, K*C_in)    folded lane-major weight
        # b_ref : (C_out, 1)         bias (f32)
        # o_ref : (Bt, C_out, T)     output tile
        # scratch[0] (if carry_halo): (Bt*C_in, P) last P input cols of prev tile
        if carry_halo:
            halo_ref = scratch[0]

            # First L tile of each batch sub-block: halo = causal left pad (zeros).
            @pl.when(pl.program_id(1) == 0)
            def _():
                halo_ref[...] = jnp.zeros_like(halo_ref)

        w = w_ref[...]
        b = b_ref[...]

        # Unrolled loop over the batch sub-block amortizes the fixed per-grid-
        # step pipeline overhead across Bt elements.
        for bi in range(Bt):
            x_tile = x_ref[bi]  # (C_in, T)
            if P > 0:
                if carry_halo:
                    halo = halo_ref[bi * c_in:(bi + 1) * c_in, :]
                else:
                    halo = jnp.zeros((c_in, P), x_tile.dtype)
                xx = jnp.concatenate([halo, x_tile], axis=1)  # (C_in, P+T)
            else:
                xx = x_tile

            # im2col of the K dilated shifts -> one MXU matmul, contraction K*C_in.
            if K > 1:
                xcol = jnp.concatenate(
                    [xx[:, j * dilation: j * dilation + T] for j in range(K)],
                    axis=0)  # (K*C_in, T)
            else:
                xcol = xx

            acc = jnp.dot(w, xcol, preferred_element_type=jnp.float32)
            acc = acc + b                                  # (C_out, T) + (C_out, 1)
            o_ref[bi] = jnp.maximum(acc, 0.0).astype(o_ref.dtype)

            if carry_halo:
                # Carry this tile's tail as the next L tile's halo (same element).
                halo_ref[bi * c_in:(bi + 1) * c_in, :] = x_tile[:, T - P:]

    return kernel


def causal_conv1d_block(x, weight, bias, dilation, *, compute_dtype=None,
                        out_dtype=jnp.float32, block_l=None, block_b=None):
    """relu(causal dilated Conv1d(x)) matching the PyTorch module.

    x: (B, C_in, L); weight: (C_out, C_in, K); bias: (C_out,).
    Returns (B, C_out, L) in `out_dtype` (f32 by default; bf16 halves store traffic).
    `compute_dtype` controls the matmul operand dtype (defaults to x.dtype so no
    host-side cast/copy of x); accumulation is always f32.
    """
    B, c_in, L = x.shape
    c_out, c_in_w, K = weight.shape
    assert c_in == c_in_w
    P = (K - 1) * dilation

    if compute_dtype is None:
        compute_dtype = x.dtype
    in_itemsize = jnp.dtype(compute_dtype).itemsize
    out_itemsize = jnp.dtype(out_dtype).itemsize

    T, nL, L_pad, Bt, vmem_limit = _plan_tiles(
        B, L, c_in, c_out, K, P, in_itemsize, out_itemsize,
        block_l=block_l, block_b=block_b)
    carry_halo = (nL > 1) and (P > 0)

    xc = x.astype(compute_dtype)
    if L_pad > L:
        # Right-pad only: the conv is causal, so output columns < L are
        # unaffected by the appended zeros; they are sliced off below.  Keeps
        # every output store lane-dense (no masked vst).
        xc = jnp.pad(xc, ((0, 0), (0, 0), (0, L_pad - L)))

    # Lane-major folded weight: w2[o, j*C_in + c] = weight[o, c, j].
    w2 = jnp.transpose(weight, (0, 2, 1)).reshape(c_out, K * c_in).astype(compute_dtype)
    bias2d = bias.reshape(c_out, 1).astype(jnp.float32)

    kernel = _make_causal_conv_kernel(c_out, c_in, K, dilation, T, Bt, carry_halo)

    scratch = ([pltpu.VMEM((Bt * c_in, max(P, 1)), compute_dtype)]
               if carry_halo else [])
    cost = pl.CostEstimate(
        flops=2 * B * c_out * K * c_in * L_pad,
        transcendentals=0,
        bytes_accessed=int(B * c_in * L_pad * in_itemsize
                           + c_out * K * c_in * in_itemsize + c_out * 4
                           + B * c_out * L_pad * out_itemsize))

    out = pl.pallas_call(
        kernel,
        out_shape=jax.ShapeDtypeStruct((B, c_out, L_pad), out_dtype),
        grid_spec=pltpu.PrefetchScalarGridSpec(
            num_scalar_prefetch=0,
            grid=(B // Bt, nL),  # L innermost: sequential only when halo carried
            in_specs=[
                pl.BlockSpec((Bt, c_in, T), lambda b, l: (b, 0, l)),
                pl.BlockSpec((c_out, K * c_in), lambda b, l: (0, 0)),
                pl.BlockSpec((c_out, 1), lambda b, l: (0, 0)),
            ],
            out_specs=pl.BlockSpec((Bt, c_out, T), lambda b, l: (b, 0, l)),
            scratch_shapes=scratch,
        ),
        compiler_params=pltpu.CompilerParams(
            dimension_semantics=("parallel",
                                 "arbitrary" if carry_halo else "parallel"),
            vmem_limit_bytes=vmem_limit),
        cost_estimate=cost,
    )(xc, w2, bias2d)

    if L_pad > L:
        out = out[:, :, :L]
    return out


def _reference(x, weight, bias, dilation):
    # Pure-JAX reference of the PyTorch forward semantics.
    B, c_in, L = x.shape
    c_out, _, K = weight.shape
    P = (K - 1) * dilation
    x_pad = jnp.pad(x.astype(jnp.float32), ((0, 0), (0, 0), (P, 0)))
    y = jnp.zeros((B, c_out, L), jnp.float32)
    for j in range(K):
        xj = x_pad[:, :, j * dilation: j * dilation + L]  # (B, C_in, L)
        y = y + jnp.einsum("oc,bcl->bol", weight[:, :, j].astype(jnp.float32), xj)
    y = y + bias[None, :, None]
    return jnp.maximum(y, 0.0)


if __name__ == "__main__":
    key = jax.random.PRNGKey(0)
    kx, kw, kb, kx2 = jax.random.split(key, 4)

    # Small config consistent with CausalConv1DBlock.
    B, C_IN, C_OUT, L = 2, 4, 8, 16
    K, DIL = 3, 2
    fan_in = C_IN * K
    bound = 1.0 / (fan_in ** 0.5)
    x = jax.random.normal(kx, (B, C_IN, L), dtype=jnp.float32)
    weight = jax.random.uniform(kw, (C_OUT, C_IN, K), jnp.float32, -bound, bound)
    bias = jax.random.uniform(kb, (C_OUT,), jnp.float32, -bound, bound)

    ref = _reference(x, weight, bias, DIL)

    # Default path: VMEM-budget-derived single L tile, batch folded, f32 out.
    out = jax.block_until_ready(causal_conv1d_block(x, weight, bias, DIL))
    assert out.shape == (B, C_OUT, L)
    assert jnp.allclose(out, ref, atol=1e-4, rtol=1e-4), "f32 mismatch vs reference"

    # Multi-L-tile path with halo carry (forced small tiles) on a longer sequence.
    L2 = 256
    x2 = jax.random.normal(kx2, (B, C_IN, L2), dtype=jnp.float32)
    ref2 = _reference(x2, weight, bias, DIL)
    out2 = jax.block_until_ready(
        causal_conv1d_block(x2, weight, bias, DIL, block_l=128, block_b=1))
    assert jnp.allclose(out2, ref2, atol=1e-4, rtol=1e-4), "tiled mismatch vs reference"

    # bf16 output stream (halves the dominant HBM store traffic); f32 accumulate.
    out_bf16 = jax.block_until_ready(
        causal_conv1d_block(x2, weight, bias, DIL, out_dtype=jnp.bfloat16))
    assert jnp.allclose(out_bf16.astype(jnp.float32), ref2, rtol=2e-2, atol=2e-2), \
        "bf16-out mismatch vs reference"

    # bf16 matmul operands (v6e/v7x MXU path), f32 accumulation: loose check.
    out_bf16c = jax.block_until_ready(
        causal_conv1d_block(x, weight, bias, DIL, compute_dtype=jnp.bfloat16))
    assert jnp.allclose(out_bf16c, ref, rtol=5e-2, atol=5e-2), \
        "bf16-compute mismatch vs reference"

    print("KERNEL_OK")
</pallas_src>

<mosaic_0001>
module attributes {stable_mosaic.version = 11 : i64} {
  func.func @kernel(%arg0: i32, %arg1: i32, %arg2: memref<2x4x128xf32, #tpu.memory_space<vmem>>, %arg3: memref<8x12xf32, #tpu.memory_space<vmem>>, %arg4: memref<8x1xf32, #tpu.memory_space<vmem>>, %arg5: memref<2x8x128xf32, #tpu.memory_space<vmem>>) attributes {dimension_semantics = [#tpu.dimension_semantics<parallel>, #tpu.dimension_semantics<parallel>], iteration_bounds = array<i64: 1, 1>, scalar_prefetch = 0 : i64, scratch_operands = 0 : i64, tpu.core_type = #tpu.core_type<tc>, window_params = [{transform_indices = @transform_0, window_bounds = array<i64: 2, 4, 128>}, {pipeline_mode = #tpu.pipeline_mode<synchronous>, transform_indices = @transform_1, window_bounds = array<i64: 8, 12>}, {pipeline_mode = #tpu.pipeline_mode<synchronous>, transform_indices = @transform_2, window_bounds = array<i64: 8, 1>}, {transform_indices = @transform_3, window_bounds = array<i64: 2, 8, 128>}]} {
    %c0 = arith.constant 0 : index
    %c0_0 = arith.constant 0 : index
    %0 = vector.load %arg3[%c0, %c0_0] : memref<8x12xf32, #tpu.memory_space<vmem>>, vector<8x12xf32>
    %c0_1 = arith.constant 0 : index
    %c0_2 = arith.constant 0 : index
    %1 = vector.load %arg4[%c0_1, %c0_2] : memref<8x1xf32, #tpu.memory_space<vmem>>, vector<8x1xf32>
    %c0_3 = arith.constant 0 : index
    %c0_4 = arith.constant 0 : index
    %c0_5 = arith.constant 0 : index
    %2 = vector.load %arg2[%c0_3, %c0_4, %c0_5] : memref<2x4x128xf32, #tpu.memory_space<vmem>>, vector<1x4x128xf32>
    %3 = vector.shape_cast %2 : vector<1x4x128xf32> to vector<4x128xf32>
    %cst = arith.constant 0.000000e+00 : f32
    %4 = vector.broadcast %cst : f32 to vector<4x4xf32>
    %5 = tpu.concatenate %4, %3 in 1 : vector<4x4xf32>, vector<4x128xf32> -> vector<4x132xf32>
    %6 = vector.extract_strided_slice %5 {offsets = [0, 0], sizes = [4, 128], strides = [1, 1]} : vector<4x132xf32> to vector<4x128xf32>
    %7 = vector.extract_strided_slice %5 {offsets = [0, 2], sizes = [4, 128], strides = [1, 1]} : vector<4x132xf32> to vector<4x128xf32>
    %8 = vector.extract_strided_slice %5 {offsets = [0, 4], sizes = [4, 128], strides = [1, 1]} : vector<4x132xf32> to vector<4x128xf32>
    %9 = tpu.concatenate %6, %7, %8 in 0 : vector<4x128xf32>, vector<4x128xf32>, vector<4x128xf32> -> vector<12x128xf32>
    %cst_6 = arith.constant dense<0.000000e+00> : vector<8x128xf32>
    %10 = tpu.matmul %0, %9, %cst_6 {dimension_numbers = #tpu.dot_dimension_numbers<[1], [0], [0], [1], [0, 0, 1, 1], [], []>} : vector<8x12xf32>, vector<12x128xf32>, vector<8x128xf32> -> vector<8x128xf32>
    %11 = vector.broadcast %1 : vector<8x1xf32> to vector<8x128xf32>
    %12 = arith.addf %10, %11 : vector<8x128xf32>
    %cst_7 = arith.constant 0.000000e+00 : f32
    %13 = vector.broadcast %cst_7 : f32 to vector<8x128xf32>
    %14 = arith.maximumf %12, %13 : vector<8x128xf32>
    %c0_8 = arith.constant 0 : index
    %c0_9 = arith.constant 0 : index
    %c0_10 = arith.constant 0 : index
    %15 = vector.load %arg5[%c0_8, %c0_9, %c0_10] : memref<2x8x128xf32, #tpu.memory_space<vmem>>, vector<1x8x128xf32>
    %16 = vector.shape_cast %15 : vector<1x8x128xf32> to vector<8x128xf32>
    %17 = vector.shape_cast %14 : vector<8x128xf32> to vector<1x8x128xf32>
    tpu.vector_store %arg5[%c0_8, %c0_9, %c0_10], %17 {strides = array<i32>} : memref<2x8x128xf32, #tpu.memory_space<vmem>>, vector<1x8x128xf32>,
    %c1 = arith.constant 1 : index
    %c0_11 = arith.constant 0 : index
    %c0_12 = arith.constant 0 : index
    %18 = vector.load %arg2[%c1, %c0_11, %c0_12] : memref<2x4x128xf32, #tpu.memory_space<vmem>>, vector<1x4x128xf32>
    %19 = vector.shape_cast %18 : vector<1x4x128xf32> to vector<4x128xf32>
    %cst_13 = arith.constant 0.000000e+00 : f32
    %20 = vector.broadcast %cst_13 : f32 to vector<4x4xf32>
    %21 = tpu.concatenate %20, %19 in 1 : vector<4x4xf32>, vector<4x128xf32> -> vector<4x132xf32>
    %22 = vector.extract_strided_slice %21 {offsets = [0, 0], sizes = [4, 128], strides = [1, 1]} : vector<4x132xf32> to vector<4x128xf32>
    %23 = vector.extract_strided_slice %21 {offsets = [0, 2], sizes = [4, 128], strides = [1, 1]} : vector<4x132xf32> to vector<4x128xf32>
    %24 = vector.extract_strided_slice %21 {offsets = [0, 4], sizes = [4, 128], strides = [1, 1]} : vector<4x132xf32> to vector<4x128xf32>
    %25 = tpu.concatenate %22, %23, %24 in 0 : vector<4x128xf32>, vector<4x128xf32>, vector<4x128xf32> -> vector<12x128xf32>
    %cst_14 = arith.constant dense<0.000000e+00> : vector<8x128xf32>
    %26 = tpu.matmul %0, %25, %cst_14 {dimension_numbers = #tpu.dot_dimension_numbers<[1], [0], [0], [1], [0, 0, 1, 1], [], []>} : vector<8x12xf32>, vector<12x128xf32>, vector<8x128xf32> -> vector<8x128xf32>
    %27 = vector.broadcast %1 : vector<8x1xf32> to vector<8x128xf32>
    %28 = arith.addf %26, %27 : vector<8x128xf32>
    %cst_15 = arith.constant 0.000000e+00 : f32
    %29 = vector.broadcast %cst_15 : f32 to vector<8x128xf32>
    %30 = arith.maximumf %28, %29 : vector<8x128xf32>
    %c1_16 = arith.constant 1 : index
    %c0_17 = arith.constant 0 : index
    %c0_18 = arith.constant 0 : index
    %31 = vector.load %arg5[%c1_16, %c0_17, %c0_18] : memref<2x8x128xf32, #tpu.memory_space<vmem>>, vector<1x8x128xf32>
    %32 = vector.shape_cast %31 : vector<1x8x128xf32> to vector<8x128xf32>
    %33 = vector.shape_cast %30 : vector<8x128xf32> to vector<1x8x128xf32>
    tpu.vector_store %arg5[%c1_16, %c0_17, %c0_18], %33 {strides = array<i32>} : memref<2x8x128xf32, #tpu.memory_space<vmem>>, vector<1x8x128xf32>,
    return
  }
  func.func @transform_0(%arg0: i32, %arg1: i32) -> (i32, i32, i32) {
    %c0_i32 = arith.constant 0 : i32
    %c0_i32_0 = arith.constant 0 : i32
    return %arg0, %c0_i32, %arg1 : i32, i32, i32
  }
  func.func @transform_1(%arg0: i32, %arg1: i32) -> (i32, i32) {
    %c0_i32 = arith.constant 0 : i32
    %c0_i32_0 = arith.constant 0 : i32
    %c0_i32_1 = arith.constant 0 : i32
    return %c0_i32, %c0_i32_0 : i32, i32
  }
  func.func @transform_2(%arg0: i32, %arg1: i32) -> (i32, i32) {
    %c0_i32 = arith.constant 0 : i32
    %c0_i32_0 = arith.constant 0 : i32
    %c0_i32_1 = arith.constant 0 : i32
    return %c0_i32, %c0_i32_0 : i32, i32
  }
  func.func @transform_3(%arg0: i32, %arg1: i32) -> (i32, i32, i32) {
    %c0_i32 = arith.constant 0 : i32
    %c0_i32_0 = arith.constant 0 : i32
    return %arg0, %c0_i32, %arg1 : i32, i32, i32
  }
}

</mosaic_0001>

<llo_original>
// kernel: tpu_custom_call.1
$region0: #{tpu_custom_call.1}
  #allocation0 [shape = 'u32[]', space=smem, size = 0x4, offset = 0x4, fixed_abs, tag = 'smem constant byte address 0x4 - core index']
  #allocation1 [shape = 'u32[144,128]{1,0:T(1,128)}', space=vmem, size = 0x12000, scoped, tag = 'internal scratch']
  %s0 = inlined_call_operand.vmem [shape: f32[2,4,128], index: 0, kind: input, shape index: {}]
  %s1 = inlined_call_operand.hbm [shape: f32[8,12], index: 1, kind: input, shape index: {}]
  %s2 = inlined_call_operand.vmem [shape: f32[8,1], index: 2, kind: input, shape index: {}]
  %s3 = inlined_call_operand.hbm [shape: f32[2,8,128], index: 3, kind: output, shape index: {}]
  %s4 = sld [smem:[#allocation0]]
  $region26: #{tpu_custom_call.1} parent=0
    _
  %s6 = ssub.s32 1, %s4
  %s7 = scalar_select 0, %s6, %s4
  $region1: #{tpu_custom_call.1} parent=0
    #allocation2 [shape = 'u8[4096]{0}', space=vmem, size = 0x1000, scoped, tag = 'input window, operand 1, single buffered']
    #allocation3 [shape = 's32[1]{0}', space=sflag, size = 0x4, scoped, tag = 'scoped memory for tpu_custom_call.1']
    #allocation4 [shape = 's32[1]{0}', space=sflag, size = 0x4, scoped, tag = 'scoped memory for tpu_custom_call.1']
    #allocation5 [shape = 'u8[8192]{0}', space=vmem, size = 0x2000, scoped, tag = 'output window, operand 0, single buffered']
    %8 = vsyncpa [#allocation3], 0
    %9 = vsyncpa [#allocation4], 0
    // Predicated region
    $region2: #{tpu_custom_call.1} parent=1 // pred_check
      _
    $region3: #{tpu_custom_call.1} parent=1 // pred_check_branch
      %11 = sbr.rel (0) target = $region5
    $region4: #{tpu_custom_call.1} parent=1 // pred_region
      _
    $region5: #{tpu_custom_call.1} parent=1 // pred_fallthru
      _
    // Predicated region
    $region6: #{tpu_custom_call.1} parent=1 // pred_check
      _
    $region7: #{tpu_custom_call.1} parent=1 // pred_check_branch
      %13 = sbr.rel (0) target = $region9
    $region8: #{tpu_custom_call.1} parent=1 // pred_region
      %s15 = ssub.s32 128, 128
      %16 = vsyncadd [#allocation3], %s15
      %s18 = sshll.u32 [#allocation2], 4
      %s19 = int_to_ptr.vmem [resolvable:$true] %s18
      %21 = dma.hbm_to_vmem [thread:$0]  %s1, 128, %s19, [#allocation3]
    $region9: #{tpu_custom_call.1} parent=1 // pred_fallthru
      _
    // Predicated region
    $region10: #{tpu_custom_call.1} parent=1 // pred_check
      _
    $region11: #{tpu_custom_call.1} parent=1 // pred_check_branch
      %23 = sbr.rel (0) target = $region13
    $region12: #{tpu_custom_call.1} parent=1 // pred_region
      _
    $region13: #{tpu_custom_call.1} parent=1 // pred_fallthru
      _
    // Predicated region
    $region14: #{tpu_custom_call.1} parent=1 // pred_check
      _
    $region15: #{tpu_custom_call.1} parent=1 // pred_check_branch
      %25 = sbr.rel (0) target = $region17
    $region16: #{tpu_custom_call.1} parent=1 // pred_region
      %26 = dma.done [#allocation3], 128
    $region17: #{tpu_custom_call.1} parent=1 // pred_fallthru
      _
    %v27 = vld [vmem:[#allocation2] sm:$0xff]
    %v28 = vld [vmem:[%s2] sm:$0xff]
    %v29 = vld [vmem:[%s0] sm:$0xf]
    %31 = vrot.lane.b32.xlu0 %v29, 4
    %v32 = vpop.permute.xlu0 %31
    %vm34 = vcmask 31744
    %v35 = vsel %vm34, 0.0, %v32
    %v37 = vrot.slane %v35, 4
    %v38 = vrot.slane %v32, 4
    %39 = vrot.lane.b32.xlu0 %v37, 126
    %v40 = vpop.permute.xlu0 %39
    %41 = vrot.lane.b32.xlu0 %v38, 126
    %v42 = vpop.permute.xlu0 %41
    %vm43 = vcmask 1031168
    %v44 = vsel %vm43, %v40, %v42
    %46 = vrot.lane.b32.xlu0 %v35, 124
    %v47 = vpop.permute.xlu0 %46
    %48 = vrot.lane.b32.xlu0 %v32, 124
    %v49 = vpop.permute.xlu0 %48
    %vm50 = vcmask 1014784
    %v51 = vsel %vm50, %v47, %v49
    %vm52 = vcmask 1043456
    %v53 = vsel %vm52, %v35, %v44
    %55 = vset.pattern.permute.xlu0 0
    %56 = vperm.xlu0 %55, %v28
    %v57 = vpop.permute.xlu0 %56
    %vm59 = vcmask 97280
    %v61 = vsel %vm59, %v27, 0
    %v63 = vsel %vm52, %v51, 0
    %65 = vmatprep.subr.mxu0 0.0
    %66 = vmatpush1.msra.mxu0 %v53
    %67 = vmatprep.subr.mxu0 0.0
    %68 = vmatpush1.msra.mxu0 %v63
    %69 = vmatprep.subr.mxu0 0.0
    %70 = vmatpush1.msra.mxu0 0.0
    %71 = vmatprep.subr.mxu0 0.0
    %72 = vmatpush1.msra.mxu0 0.0
    %73 = vmatprep.subr.mxu0 0.0
    %74 = vmatpush1.msra.mxu0 0.0
    %75 = vmatprep.subr.mxu0 0.0
    %76 = vmatpush1.msra.mxu0 0.0
    %77 = vmatprep.subr.mxu0 0.0
    %78 = vmatpush1.msra.mxu0 0.0
    %79 = vmatprep.subr.mxu0 0.0
    %80 = vmatpush1.msra.mxu0 0.0
    %81 = vmatprep.subr.mxu0 0.0
    %82 = vmatpush1.msra.mxu0 0.0
    %83 = vmatprep.subr.mxu0 0.0
    %84 = vmatpush1.msra.mxu0 0.0
    %85 = vmatprep.subr.mxu0 0.0
    %86 = vmatpush1.msra.mxu0 0.0
    %87 = vmatprep.subr.mxu0 0.0
    %88 = vmatpush1.msra.mxu0 0.0
    %89 = vmatprep.subr.mxu0 0.0
    %90 = vmatpush1.msra.mxu0 0.0
    %91 = vmatprep.subr.mxu0 0.0
    %92 = vmatpush1.msra.mxu0 0.0
    %93 = vmatprep.subr.mxu0 0.0
    %94 = vmatpush1.msra.mxu0 0.0
    %95 = vmatprep.subr.mxu0 0.0
    %96 = vmatpush1.msra.mxu0 0.0
    %97 = vmatprep.subr.mxu0 0.0
    %98 = vmatpush1.msra.mxu0 0.0
    %99 = vmatprep.subr.mxu0 0.0
    %100 = vmatpush1.msra.mxu0 0.0
    %101 = vmatprep.subr.mxu0 0.0
    %102 = vmatpush1.msra.mxu0 0.0
    %103 = vmatprep.subr.mxu0 0.0
    %104 = vmatpush1.msra.mxu0 0.0
    %105 = vmatprep.subr.mxu0 0.0
    %106 = vmatpush1.msra.mxu0 0.0
    %107 = vmatprep.subr.mxu0 0.0
    %108 = vmatpush1.msra.mxu0 0.0
    %109 = vmatprep.subr.mxu0 0.0
    %110 = vmatpush1.msra.mxu0 0.0
    %111 = vmatprep.subr.mxu0 0.0
    %112 = vmatpush1.msra.mxu0 0.0
    %113 = vmatprep.subr.mxu0 0.0
    %114 = vmatpush1.msra.mxu0 0.0
    %115 = vmatprep.subr.mxu0 0.0
    %116 = vmatpush1.msra.mxu0 0.0
    %117 = vmatprep.subr.mxu0 0.0
    %118 = vmatpush1.msra.mxu0 0.0
    %119 = vmatprep.subr.mxu0 0.0
    %120 = vmatpush1.msra.mxu0 0.0
    %121 = vmatprep.subr.mxu0 0.0
    %122 = vmatpush1.msra.mxu0 0.0
    %123 = vmatprep.subr.mxu0 0.0
    %124 = vmatpush1.msra.mxu0 0.0
    %125 = vmatprep.subr.mxu0 0.0
    %126 = vmatpush1.msra.mxu0 0.0
    %127 = vmatprep.subr.mxu0 0.0
    %128 = vmatpush1.msra.mxu0 0.0
    %129 = vmatprep.mubr.f32.mxu0 0.0
    %130 = vmatmul.mubr.f32.gmra.mrb[0].mxu0 %v61
    %v131 = vpop.f32.mrb[0].mxu0
    %v132 = vadd.f32 %v57, %v131
    %v133 = vpop.f32.mrb[0].mxu0
    %134 = vdwg.mxu0
    %v135 = vmax.f32 %v132, 0.0
    %136 = vst [vmem:[#allocation5] sm:$0xff] %v135
    %s137 = scalar_lea.vmem %s0, 4
    %v138 = vld [vmem:[%s137] sm:$0xf]
    %140 = vrot.lane.b32.xlu0 %v138, 4
    %v141 = vpop.permute.xlu0 %140
    %v143 = vsel %vm34, 0.0, %v141
    %v145 = vrot.slane %v143, 4
    %v146 = vrot.slane %v141, 4
    %147 = vrot.lane.b32.xlu0 %v145, 126
    %v148 = vpop.permute.xlu0 %147
    %149 = vrot.lane.b32.xlu0 %v146, 126
    %v150 = vpop.permute.xlu0 %149
    %v151 = vsel %vm43, %v148, %v150
    %153 = vrot.lane.b32.xlu0 %v143, 124
    %v154 = vpop.permute.xlu0 %153
    %155 = vrot.lane.b32.xlu0 %v141, 124
    %v156 = vpop.permute.xlu0 %155
    %v157 = vsel %vm50, %v154, %v156
    %v158 = vsel %vm52, %v143, %v151
    %v159 = vsel %vm52, %v157, 0
    %161 = vmatprep.subr.mxu0 0.0
    %162 = vmatpush1.msra.mxu0 %v158
    %163 = vmatprep.subr.mxu0 0.0
    %164 = vmatpush1.msra.mxu0 %v159
    %165 = vmatprep.subr.mxu0 0.0
    %166 = vmatpush1.msra.mxu0 0.0
    %167 = vmatprep.subr.mxu0 0.0
    %168 = vmatpush1.msra.mxu0 0.0
    %169 = vmatprep.subr.mxu0 0.0
    %170 = vmatpush1.msra.mxu0 0.0
    %171 = vmatprep.subr.mxu0 0.0
    %172 = vmatpush1.msra.mxu0 0.0
    %173 = vmatprep.subr.mxu0 0.0
    %174 = vmatpush1.msra.mxu0 0.0
    %175 = vmatprep.subr.mxu0 0.0
    %176 = vmatpush1.msra.mxu0 0.0
    %177 = vmatprep.subr.mxu0 0.0
    %178 = vmatpush1.msra.mxu0 0.0
    %179 = vmatprep.subr.mxu0 0.0
    %180 = vmatpush1.msra.mxu0 0.0
    %181 = vmatprep.subr.mxu0 0.0
    %182 = vmatpush1.msra.mxu0 0.0
    %183 = vmatprep.subr.mxu0 0.0
    %184 = vmatpush1.msra.mxu0 0.0
    %185 = vmatprep.subr.mxu0 0.0
    %186 = vmatpush1.msra.mxu0 0.0
    %187 = vmatprep.subr.mxu0 0.0
    %188 = vmatpush1.msra.mxu0 0.0
    %189 = vmatprep.subr.mxu0 0.0
    %190 = vmatpush1.msra.mxu0 0.0
    %191 = vmatprep.subr.mxu0 0.0
    %192 = vmatpush1.msra.mxu0 0.0
    %193 = vmatprep.subr.mxu0 0.0
    %194 = vmatpush1.msra.mxu0 0.0
    %195 = vmatprep.subr.mxu0 0.0
    %196 = vmatpush1.msra.mxu0 0.0
    %197 = vmatprep.subr.mxu0 0.0
    %198 = vmatpush1.msra.mxu0 0.0
    %199 = vmatprep.subr.mxu0 0.0
    %200 = vmatpush1.msra.mxu0 0.0
    %201 = vmatprep.subr.mxu0 0.0
    %202 = vmatpush1.msra.mxu0 0.0
    %203 = vmatprep.subr.mxu0 0.0
    %204 = vmatpush1.msra.mxu0 0.0
    %205 = vmatprep.subr.mxu0 0.0
    %206 = vmatpush1.msra.mxu0 0.0
    %207 = vmatprep.subr.mxu0 0.0
    %208 = vmatpush1.msra.mxu0 0.0
    %209 = vmatprep.subr.mxu0 0.0
    %210 = vmatpush1.msra.mxu0 0.0
    %211 = vmatprep.subr.mxu0 0.0
    %212 = vmatpush1.msra.mxu0 0.0
    %213 = vmatprep.subr.mxu0 0.0
    %214 = vmatpush1.msra.mxu0 0.0
    %215 = vmatprep.subr.mxu0 0.0
    %216 = vmatpush1.msra.mxu0 0.0
    %217 = vmatprep.subr.mxu0 0.0
    %218 = vmatpush1.msra.mxu0 0.0
    %219 = vmatprep.subr.mxu0 0.0
    %220 = vmatpush1.msra.mxu0 0.0
    %221 = vmatprep.subr.mxu0 0.0
    %222 = vmatpush1.msra.mxu0 0.0
    %223 = vmatprep.subr.mxu0 0.0
    %224 = vmatpush1.msra.mxu0 0.0
    %225 = vmatprep.mubr.f32.mxu0 0.0
    %226 = vmatmul.mubr.f32.gmra.mrb[0].mxu0 %v61
    %v227 = vpop.f32.mrb[0].mxu0
    %v228 = vadd.f32 %v57, %v227
    %v229 = vpop.f32.mrb[0].mxu0
    %230 = vdwg.mxu0
    %v231 = vmax.f32 %v228, 0.0
    %s232 = scalar_lea.vmem [#allocation5], 8
    %233 = vst [vmem:[%s232] sm:$0xff] %v231
    // Predicated region
    $region18: #{tpu_custom_call.1} parent=1 // pred_check
      _
    $region19: #{tpu_custom_call.1} parent=1 // pred_check_branch
      %235 = sbr.rel (0) target = $region21
    $region20: #{tpu_custom_call.1} parent=1 // pred_region
      %s237 = ssub.s32 256, 256
      %238 = vsyncadd [#allocation4], %s237
      %s239 = sshll.u32 [#allocation5], 4
      %s240 = int_to_ptr.vmem [resolvable:$true] %s239
      %245 = dma.vmem_to_hbm [thread:$0]  %s240, 256, %s3, [#allocation4], 128, 128, 8
    $region21: #{tpu_custom_call.1} parent=1 // pred_fallthru
      _
    // Predicated region
    $region22: #{tpu_custom_call.1} parent=1 // pred_check
      _
    $region23: #{tpu_custom_call.1} parent=1 // pred_check_branch
      %247 = sbr.rel (0) target = $region25
    $region24: #{tpu_custom_call.1} parent=1 // pred_region
      %248 = dma.done [#allocation4], 256
    $region25: #{tpu_custom_call.1} parent=1 // pred_fallthru
      _
    %249 = vsyncpa [#allocation3], 1
    %250 = vsyncpa [#allocation4], 1

</llo_original>
